<compile_context>
chip_gen: v5e
topology: v5e:2x2
jax: 0.10.0
libtpu: 0.0.40
codegen_flags: <defaults>
</compile_context>

<pallas_src>
import math

import jax
import jax.numpy as jnp
from jax.experimental import pallas as pl
from jax.experimental.pallas import tpu as pltpu


_LANE = 128
_SUBLANE = 8
_TARGET_BLOCK_BYTES = 4 * 1024 * 1024   # ~4 MiB per input block (v7x sweet spot)
_VMEM_LIMIT_BYTES = 48 * 1024 * 1024    # 3 streams x 2 bufs x 4 MiB = 24 MiB << 48 MiB
_MIN_PALLAS_BYTES = 1 << 20             # below this, a single fused XLA op wins
_MEGACORE_MIN_BYTES = 8 * 1024 * 1024   # force >=2 row steps above this


def fusion_kernel(x1_ref, x2_ref, p_ref, o_ref):
    # x1/x2/o: (rb, cb) lane-dense tiles; p: (3, cb) packed rows [w1; w2; b1+b2].
    o_ref[...] = (
        x1_ref[...] * p_ref[0:1, :]
        + x2_ref[...] * p_ref[1:2, :]
        + p_ref[2:3, :]
    )


def _pick_layout(B, S, D):
    """Choose an (R, C) lane-dense view of the flattened (B*S*D,) data.

    C is a multiple of D (so the D-periodic params tile exactly) and, when
    possible, a multiple of 128 near 512-2048 for unmasked full-lane stores.
    """
    N = B * S * D
    L = S * D
    base = (D * _LANE) // math.gcd(D, _LANE)  # lcm(D, 128)
    if N % base == 0:
        m = N // base
        k_max = max(1, 2048 // base)
        k = 1
        for cand in range(min(m, k_max), 0, -1):
            if m % cand == 0:
                k = cand
                break
        C = k * base
    else:
        # Fallback: per-batch rows with full-row blocks (always legal; only
        # loses lane density when S*D is not a multiple of 128).
        C = L
    return N // C, C


def _pick_tiles(R, C, itemsize):
    """Row/col block sizes targeting ~_TARGET_BLOCK_BYTES per input block."""
    row_bytes = C * itemsize
    if _SUBLANE * row_bytes > _TARGET_BLOCK_BYTES:
        # Very long rows: tile the lane dimension too (multiple of 128).
        cb = max(_LANE, (_TARGET_BLOCK_BYTES // (_SUBLANE * itemsize)) // _LANE * _LANE)
        rb = min(_SUBLANE, R)
    else:
        cb = C
        rows_target = max(1, _TARGET_BLOCK_BYTES // row_bytes)
        if rows_target >= R:
            rb = R
        else:
            rb = max(_SUBLANE, (rows_target // _SUBLANE) * _SUBLANE)
    # Megacore (v7x): make sure the row grid has >=2 steps on big problems.
    total_bytes = 2 * R * C * itemsize
    if total_bytes > _MEGACORE_MIN_BYTES and rb >= R and R >= 2 * _SUBLANE:
        rb = pl.cdiv(pl.cdiv(R, 2), _SUBLANE) * _SUBLANE
    return rb, cb


def fusion_net(input1, input2, weight1, weight2, bias1, bias2, *, force_pallas=False):
    """output = input1 * weight1 + bias1 + input2 * weight2 + bias2 (broadcast)."""
    B, S, D = input1.shape
    dtype = input1.dtype
    itemsize = jnp.dtype(dtype).itemsize

    total_in_bytes = 2 * B * S * D * itemsize
    if not force_pallas and total_in_bytes < _MIN_PALLAS_BYTES:
        # Launch + DMA setup dominates at these sizes; let XLA fuse it.
        w1 = weight1.reshape(1, 1, D)
        w2 = weight2.reshape(1, 1, D)
        return (input1 * w1 + bias1) + (input2 * w2 + bias2)

    R, C = _pick_layout(B, S, D)
    rb, cb = _pick_tiles(R, C, itemsize)

    # Lane-dense inputs and packed grid-invariant params (C is a multiple of D).
    x1 = input1.reshape(R, C)
    x2 = input2.reshape(R, C)
    reps = C // D
    w1r = jnp.tile(weight1.reshape(1, D).astype(dtype), (1, reps))
    w2r = jnp.tile(weight2.reshape(1, D).astype(dtype), (1, reps))
    br = jnp.tile((bias1 + bias2).reshape(1, D).astype(dtype), (1, reps))
    params = jnp.concatenate([w1r, w2r, br], axis=0)  # (3, C)

    grid = (pl.cdiv(R, rb), pl.cdiv(C, cb))
    x_spec = pl.BlockSpec((rb, cb), lambda i, j: (i, j))
    p_spec = pl.BlockSpec((3, cb), lambda i, j: (0, j))

    out = pl.pallas_call(
        fusion_kernel,
        out_shape=jax.ShapeDtypeStruct((R, C), dtype),
        grid=grid,
        in_specs=[x_spec, x_spec, p_spec],
        out_specs=x_spec,
        compiler_params=pltpu.CompilerParams(
            dimension_semantics=("parallel", "parallel"),
            vmem_limit_bytes=_VMEM_LIMIT_BYTES,
        ),
    )(x1, x2, params)

    return out.reshape(B, S, D)


def _reference(input1, input2, weight1, weight2, bias1, bias2):
    D = input1.shape[-1]
    w1 = weight1.reshape(1, 1, D)
    w2 = weight2.reshape(1, 1, D)
    return (input1 * w1 + bias1) + (input2 * w2 + bias2)


if __name__ == "__main__":
    key = jax.random.PRNGKey(0)
    k1, k2, kw1, kw2, kb1, kb2, k3, k4 = jax.random.split(key, 8)

    # Small demo shape consistent with the module (input_size = 32).
    B, S, D = 2, 8, 32
    input1 = jax.random.normal(k1, (B, S, D), dtype=jnp.float32)
    input2 = jax.random.normal(k2, (B, S, D), dtype=jnp.float32)
    weight1 = jax.random.uniform(kw1, (1, 1, D), dtype=jnp.float32)
    weight2 = jax.random.uniform(kw2, (1, 1, D), dtype=jnp.float32)
    bias1 = jax.random.uniform(kb1, (D,), dtype=jnp.float32)
    bias2 = jax.random.uniform(kb2, (D,), dtype=jnp.float32)

    out = fusion_net(input1, input2, weight1, weight2, bias1, bias2,
                     force_pallas=True)
    out = jax.block_until_ready(out)
    ref = _reference(input1, input2, weight1, weight2, bias1, bias2)
    assert out.shape == (B, S, D)
    assert jnp.allclose(out, ref, atol=1e-5, rtol=1e-5)

    # Medium shape: exercises the multi-step row grid (streaming tile path).
    Bm, Sm, Dm = 32, 256, 256
    x1m = jax.random.normal(k3, (Bm, Sm, Dm), dtype=jnp.float32)
    x2m = jax.random.normal(k4, (Bm, Sm, Dm), dtype=jnp.float32)
    w1m = jax.random.uniform(kw1, (1, 1, Dm), dtype=jnp.float32)
    w2m = jax.random.uniform(kw2, (1, 1, Dm), dtype=jnp.float32)
    b1m = jax.random.uniform(kb1, (Dm,), dtype=jnp.float32)
    b2m = jax.random.uniform(kb2, (Dm,), dtype=jnp.float32)

    out_m = fusion_net(x1m, x2m, w1m, w2m, b1m, b2m)
    out_m = jax.block_until_ready(out_m)
    ref_m = _reference(x1m, x2m, w1m, w2m, b1m, b2m)
    assert out_m.shape == (Bm, Sm, Dm)
    assert jnp.allclose(out_m, ref_m, atol=1e-5, rtol=1e-5)

    print("KERNEL_OK")
</pallas_src>

<mosaic_0001>
module attributes {stable_mosaic.version = 11 : i64} {
  func.func @fusion_kernel(%arg0: i32, %arg1: i32, %arg2: memref<1x512xf32, #tpu.memory_space<vmem>>, %arg3: memref<1x512xf32, #tpu.memory_space<vmem>>, %arg4: memref<3x512xf32, #tpu.memory_space<vmem>>, %arg5: memref<1x512xf32, #tpu.memory_space<vmem>>) attributes {dimension_semantics = [#tpu.dimension_semantics<parallel>, #tpu.dimension_semantics<parallel>], iteration_bounds = array<i64: 1, 1>, scalar_prefetch = 0 : i64, scratch_operands = 0 : i64, tpu.core_type = #tpu.core_type<tc>, window_params = [{transform_indices = @transform_0, window_bounds = array<i64: 1, 512>}, {transform_indices = @transform_1, window_bounds = array<i64: 1, 512>}, {transform_indices = @transform_2, window_bounds = array<i64: 3, 512>}, {transform_indices = @transform_3, window_bounds = array<i64: 1, 512>}]} {
    %c0 = arith.constant 0 : index
    %c0_0 = arith.constant 0 : index
    %0 = vector.load %arg2[%c0, %c0_0] : memref<1x512xf32, #tpu.memory_space<vmem>>, vector<1x512xf32>
    %c0_1 = arith.constant 0 : index
    %c0_2 = arith.constant 0 : index
    %1 = vector.load %arg4[%c0_1, %c0_2] : memref<3x512xf32, #tpu.memory_space<vmem>>, vector<1x512xf32>
    %2 = arith.mulf %0, %1 : vector<1x512xf32>
    %c0_3 = arith.constant 0 : index
    %c0_4 = arith.constant 0 : index
    %3 = vector.load %arg3[%c0_3, %c0_4] : memref<1x512xf32, #tpu.memory_space<vmem>>, vector<1x512xf32>
    %c1 = arith.constant 1 : index
    %c0_5 = arith.constant 0 : index
    %4 = vector.load %arg4[%c1, %c0_5] : memref<3x512xf32, #tpu.memory_space<vmem>>, vector<1x512xf32>
    %5 = arith.mulf %3, %4 : vector<1x512xf32>
    %6 = arith.addf %2, %5 : vector<1x512xf32>
    %c2 = arith.constant 2 : index
    %c0_6 = arith.constant 0 : index
    %7 = vector.load %arg4[%c2, %c0_6] : memref<3x512xf32, #tpu.memory_space<vmem>>, vector<1x512xf32>
    %8 = arith.addf %6, %7 : vector<1x512xf32>
    %c0_7 = arith.constant 0 : index
    %c0_8 = arith.constant 0 : index
    %9 = vector.load %arg5[%c0_7, %c0_8] : memref<1x512xf32, #tpu.memory_space<vmem>>, vector<1x512xf32>
    tpu.vector_store %arg5[%c0_7, %c0_8], %8 {strides = array<i32>} : memref<1x512xf32, #tpu.memory_space<vmem>>, vector<1x512xf32>,
    return
  }
  func.func @transform_0(%arg0: i32, %arg1: i32) -> (i32, i32) {
    %c0_i32 = arith.constant 0 : i32
    return %arg0, %arg1 : i32, i32
  }
  func.func @transform_1(%arg0: i32, %arg1: i32) -> (i32, i32) {
    %c0_i32 = arith.constant 0 : i32
    return %arg0, %arg1 : i32, i32
  }
  func.func @transform_2(%arg0: i32, %arg1: i32) -> (i32, i32) {
    %c0_i32 = arith.constant 0 : i32
    %c0_i32_0 = arith.constant 0 : i32
    return %c0_i32, %arg1 : i32, i32
  }
  func.func @transform_3(%arg0: i32, %arg1: i32) -> (i32, i32) {
    %c0_i32 = arith.constant 0 : i32
    return %arg0, %arg1 : i32, i32
  }
}

</mosaic_0001>

<llo_original>
// kernel: tpu_custom_call.1
$region0: #{tpu_custom_call.1}
  #allocation0 [shape = 'u32[]', space=smem, size = 0x4, offset = 0x4, fixed_abs, tag = 'smem constant byte address 0x4 - core index']
  #allocation1 [shape = 'u32[72,128]{1,0:T(1,128)}', space=vmem, size = 0x9000, scoped, tag = 'internal scratch']
  %s0 = inlined_call_operand.hbm [shape: f32[1,512], index: 0, kind: input, shape index: {}]
  %s1 = inlined_call_operand.hbm [shape: f32[1,512], index: 1, kind: input, shape index: {}]
  %s2 = inlined_call_operand.hbm [shape: f32[3,512], index: 2, kind: input, shape index: {}]
  %s3 = inlined_call_operand.hbm [shape: f32[1,512], index: 3, kind: output, shape index: {}]
  %s4 = sld [smem:[#allocation0]]
  $region34: #{tpu_custom_call.1} parent=0
    _
  %s6 = ssub.s32 1, %s4
  %s7 = scalar_select 0, %s6, %s4
  $region1: #{tpu_custom_call.1} parent=0
    #allocation2 [shape = 'u8[2048]{0}', space=vmem, size = 0x800, scoped, tag = 'input window, operand 0, single buffered']
    #allocation3 [shape = 's32[1]{0}', space=sflag, size = 0x4, scoped, tag = 'scoped memory for tpu_custom_call.1']
    #allocation4 [shape = 's32[1]{0}', space=sflag, size = 0x4, scoped, tag = 'scoped memory for tpu_custom_call.1']
    #allocation5 [shape = 'u8[2048]{0}', space=vmem, size = 0x800, scoped, tag = 'input window, operand 1, single buffered']
    #allocation6 [shape = 's32[1]{0}', space=sflag, size = 0x4, scoped, tag = 'scoped memory for tpu_custom_call.1']
    #allocation7 [shape = 'u8[8192]{0}', space=vmem, size = 0x2000, scoped, tag = 'input window, operand 2, single buffered']
    #allocation8 [shape = 'u8[2048]{0}', space=vmem, size = 0x800, scoped, tag = 'output window, operand 0, single buffered']
    %8 = vsyncpa [#allocation3], 0
    %9 = vsyncpa [#allocation6], 0
    %10 = vsyncpa [#allocation4], 0
    // Predicated region
    $region2: #{tpu_custom_call.1} parent=1 // pred_check
      _
    $region3: #{tpu_custom_call.1} parent=1 // pred_check_branch
      %12 = sbr.rel (0) target = $region5
    $region4: #{tpu_custom_call.1} parent=1 // pred_region
      %14 = vsyncadd [#allocation3], 0
      %s16 = sshll.u32 %s0, 4
      %s17 = int_to_ptr.hbm [resolvable:$true] %s16
      %s18 = sshll.u32 [#allocation2], 4
      %s19 = int_to_ptr.vmem [resolvable:$true] %s18
      %21 = dma.hbm_to_vmem [thread:$0]  %s17, 64, %s19, [#allocation3]
    $region5: #{tpu_custom_call.1} parent=1 // pred_fallthru
      _
    // Predicated region
    $region6: #{tpu_custom_call.1} parent=1 // pred_check
      _
    $region7: #{tpu_custom_call.1} parent=1 // pred_check_branch
      %23 = sbr.rel (0) target = $region9
    $region8: #{tpu_custom_call.1} parent=1 // pred_region
      %25 = vsyncadd [#allocation6], 0
      %s27 = sshll.u32 %s1, 4
      %s28 = int_to_ptr.hbm [resolvable:$true] %s27
      %s29 = sshll.u32 [#allocation5], 4
      %s30 = int_to_ptr.vmem [resolvable:$true] %s29
      %32 = dma.hbm_to_vmem [thread:$0]  %s28, 64, %s30, [#allocation6]
    $region9: #{tpu_custom_call.1} parent=1 // pred_fallthru
      _
    // Predicated region
    $region10: #{tpu_custom_call.1} parent=1 // pred_check
      _
    $region11: #{tpu_custom_call.1} parent=1 // pred_check_branch
      %34 = sbr.rel (0) target = $region13
    $region12: #{tpu_custom_call.1} parent=1 // pred_region
      %36 = vsyncadd [#allocation6], 0
      %s38 = sshll.u32 %s2, 4
      %s39 = int_to_ptr.hbm [resolvable:$true] %s38
      %s40 = sshll.u32 [#allocation7], 4
      %s41 = int_to_ptr.vmem [resolvable:$true] %s40
      %43 = dma.hbm_to_vmem [thread:$0]  %s39, 256, %s41, [#allocation6]
    $region13: #{tpu_custom_call.1} parent=1 // pred_fallthru
      _
    // Predicated region
    $region14: #{tpu_custom_call.1} parent=1 // pred_check
      _
    $region15: #{tpu_custom_call.1} parent=1 // pred_check_branch
      %45 = sbr.rel (0) target = $region17
    $region16: #{tpu_custom_call.1} parent=1 // pred_region
      %47 = dma.done [#allocation3], 64
    $region17: #{tpu_custom_call.1} parent=1 // pred_fallthru
      _
    // Predicated region
    $region18: #{tpu_custom_call.1} parent=1 // pred_check
      _
    $region19: #{tpu_custom_call.1} parent=1 // pred_check_branch
      %49 = sbr.rel (0) target = $region21
    $region20: #{tpu_custom_call.1} parent=1 // pred_region
      %51 = dma.done [#allocation6], 64
    $region21: #{tpu_custom_call.1} parent=1 // pred_fallthru
      _
    // Predicated region
    $region22: #{tpu_custom_call.1} parent=1 // pred_check
      _
    $region23: #{tpu_custom_call.1} parent=1 // pred_check_branch
      %53 = sbr.rel (0) target = $region25
    $region24: #{tpu_custom_call.1} parent=1 // pred_region
      %55 = dma.done [#allocation6], 256
    $region25: #{tpu_custom_call.1} parent=1 // pred_fallthru
      _
    %v56 = vld [vmem:[#allocation2] sm:$0xf]
    %v57 = vld [vmem:[#allocation7] ss:$4 sm:$0xf]
    %v58 = vmul.f32 %v56, %v57
    %v59 = vld [vmem:[#allocation5] sm:$0xf]
    %s60 = scalar_lea.vmem [#allocation7], 1
    %v61 = vld [vmem:[%s60] ss:$4 sm:$0xf]
    %v62 = vmul.f32 %v59, %v61
    %v63 = vadd.f32 %v58, %v62
    %s64 = scalar_lea.vmem [#allocation7], 2
    %v65 = vld [vmem:[%s64] ss:$4 sm:$0xf]
    %v66 = vadd.f32 %v63, %v65
    %v67 = vlaneseq
    %vm68 = vcmp.ge.s32.totalorder %v67, 0
    %vm69 = vcmp.lt.s32.totalorder %v67, 512
    %vm70 = vmand %vm68, %vm69
    %71 = vst.msk [vmem:[#allocation8] sm:$0xf] %vm70, %v66
    // Predicated region
    $region26: #{tpu_custom_call.1} parent=1 // pred_check
      _
    $region27: #{tpu_custom_call.1} parent=1 // pred_check_branch
      %73 = sbr.rel (0) target = $region29
    $region28: #{tpu_custom_call.1} parent=1 // pred_region
      %75 = vsyncadd [#allocation4], 0
      %s77 = sshll.u32 [#allocation8], 4
      %s78 = int_to_ptr.vmem [resolvable:$true] %s77
      %s79 = sshll.u32 %s3, 4
      %s80 = int_to_ptr.hbm [resolvable:$true] %s79
      %82 = dma.vmem_to_hbm [thread:$0]  %s78, 64, %s80, [#allocation4]
    $region29: #{tpu_custom_call.1} parent=1 // pred_fallthru
      _
    // Predicated region
    $region30: #{tpu_custom_call.1} parent=1 // pred_check
      _
    $region31: #{tpu_custom_call.1} parent=1 // pred_check_branch
      %84 = sbr.rel (0) target = $region33
    $region32: #{tpu_custom_call.1} parent=1 // pred_region
      %86 = dma.done [#allocation4], 64
    $region33: #{tpu_custom_call.1} parent=1 // pred_fallthru
      _
    %87 = vsyncpa [#allocation3], 1
    %88 = vsyncpa [#allocation6], 1
    %89 = vsyncpa [#allocation4], 1

</llo_original>
